<compile_context>
chip_gen: v7x
topology: tpu7x:2x2x1
jax: 0.10.0
libtpu: 0.0.40
codegen_flags: <defaults>
</compile_context>

<pallas_src>
import math
import numpy as np
import jax
import jax.numpy as jnp
from jax.experimental import pallas as pl
from jax.experimental.pallas import tpu as pltpu

# ----------------------------- config -----------------------------
DIM = 32
NUM_HEADS = 4
SEQ = 8
BATCH = 2
LN_EPS = 1e-5
NEG_INF = -1e30


# ----------------------------- pallas wrapper + kernel -----------------------------
def mhsa_pallas(x, ln_gamma, ln_beta, in_proj_weight, out_proj_weight, num_heads=NUM_HEADS):
    B, S, D = x.shape
    hd = D // num_heads
    rows = B * S
    scale = 1.0 / math.sqrt(hd)

    # --- wrapper-side weight prep (one-time XLA ops, free w.r.t. the kernel) ---
    wq, wk, wv = jnp.split(in_proj_weight, 3, axis=0)                  # each (D, D)
    # Fused Q/V weight, pre-transposed, softmax scale folded into Wq, pre-cast to bf16.
    wqv_t = jnp.concatenate([wq * scale, wv], axis=0).T.astype(jnp.bfloat16)   # (D, 2D)
    wk_bf = wk.astype(jnp.bfloat16)                                    # (D, D): K^T = Wk @ xn^T
    wo_t = out_proj_weight.T.astype(jnp.bfloat16)                      # (D, D) == Wo^T

    x2d = x.reshape(rows, D)
    gamma2d = ln_gamma.reshape(1, D)
    beta2d = ln_beta.reshape(1, D)

    # Static block-diagonal batch mask (0 within a batch's block, -inf across batches),
    # built at trace time with numpy -- no in-kernel iota/compare/where.
    bidx = np.arange(rows) // S
    mask_np = np.where(bidx[:, None] == bidx[None, :], 0.0, NEG_INF).astype(np.float32)
    mask = jnp.asarray(mask_np)                                        # (rows, rows) f32

    def kernel(x_ref, g_ref, b_ref, mask_ref, wqv_ref, wk_ref, wo_ref, o_ref):
        xf = x_ref[...].astype(jnp.float32)                            # (rows, D)
        g = g_ref[...].astype(jnp.float32)                             # (1, D)
        bt = b_ref[...].astype(jnp.float32)                            # (1, D)
        bias = mask_ref[...]                                           # (rows, rows) f32

        # --- LayerNorm over last dim (PyTorch nn.LayerNorm semantics, eps=1e-5), f32 ---
        mean = jnp.mean(xf, axis=-1, keepdims=True)
        var = jnp.mean((xf - mean) ** 2, axis=-1, keepdims=True)
        xn = (xf - mean) * jax.lax.rsqrt(var + LN_EPS) * g + bt        # (rows, D) f32

        # --- downcast only at the MXU operand boundary ---
        xn_bf = xn.astype(jnp.bfloat16)                                # (rows, D)
        xnT_bf = xn_bf.T                                               # (D, rows): one transpose

        # Fused Q/V projection (Q pre-scaled) and pre-transposed K, f32 accumulation.
        qv = jnp.dot(xn_bf, wqv_ref[...],
                     preferred_element_type=jnp.float32)               # (rows, 2D) f32
        kT = jnp.dot(wk_ref[...], xnT_bf,
                     preferred_element_type=jnp.float32)               # (D, rows) f32
        qv_bf = qv.astype(jnp.bfloat16)
        kT_bf = kT.astype(jnp.bfloat16)

        head_outs = []
        for h in range(num_heads):                                     # static unroll (4 heads)
            lo = h * hd
            qh = qv_bf[:, lo:lo + hd]                                  # (rows, hd), pre-scaled
            kTh = kT_bf[lo:lo + hd, :]                                 # (hd, rows) sublane slice
            vh = qv_bf[:, D + lo:D + lo + hd]                          # (rows, hd)

            # Scores in f32; mask added after the f32-accumulated matmul.
            s = jnp.dot(qh, kTh, preferred_element_type=jnp.float32) + bias    # (rows, rows)
            s = s - jnp.max(s, axis=-1, keepdims=True)                 # keep for robustness
            p = jnp.exp(s)
            p = p * pl.reciprocal(jnp.sum(p, axis=-1, keepdims=True), approx=True)

            ho = jnp.dot(p.astype(jnp.bfloat16), vh,
                         preferred_element_type=jnp.float32)           # (rows, hd) f32
            head_outs.append(ho.astype(jnp.bfloat16))

        # Single output projection: one (rows, D) x (D, D) MXU pass instead of four K=8 dots.
        attn = jnp.concatenate(head_outs, axis=-1)                     # (rows, D) bf16
        out = jnp.dot(attn, wo_ref[...], preferred_element_type=jnp.float32)   # (rows, D) f32

        o_ref[...] = out.astype(o_ref.dtype)

    out2d = pl.pallas_call(
        kernel,
        out_shape=jax.ShapeDtypeStruct((rows, D), x.dtype),
        in_specs=[pl.BlockSpec(memory_space=pltpu.MemorySpace.VMEM)] * 7,
        out_specs=pl.BlockSpec(memory_space=pltpu.MemorySpace.VMEM),
    )(x2d, gamma2d, beta2d, mask, wqv_t, wk_bf, wo_t)
    return out2d.reshape(B, S, D)


# ----------------------------- pure-JAX reference -----------------------------
def mhsa_reference(x, ln_gamma, ln_beta, in_proj_weight, out_proj_weight, num_heads):
    B, S, D = x.shape
    hd = D // num_heads
    mean = x.mean(-1, keepdims=True)
    var = ((x - mean) ** 2).mean(-1, keepdims=True)
    xn = (x - mean) / jnp.sqrt(var + LN_EPS) * ln_gamma + ln_beta
    wq, wk, wv = jnp.split(in_proj_weight, 3, axis=0)
    q = xn @ wq.T
    k = xn @ wk.T
    v = xn @ wv.T
    q = q.reshape(B, S, num_heads, hd).transpose(0, 2, 1, 3)
    k = k.reshape(B, S, num_heads, hd).transpose(0, 2, 1, 3)
    v = v.reshape(B, S, num_heads, hd).transpose(0, 2, 1, 3)
    s = jnp.einsum("bhqd,bhkd->bhqk", q, k) / math.sqrt(hd)
    p = jax.nn.softmax(s, axis=-1)
    o = jnp.einsum("bhqk,bhkd->bhqd", p, v)
    o = o.transpose(0, 2, 1, 3).reshape(B, S, D)
    return o @ out_proj_weight.T


# ----------------------------- main -----------------------------
if __name__ == "__main__":
    key = jax.random.PRNGKey(0)
    k_x, k_ln_g, k_ln_b, k_in, k_out = jax.random.split(key, 5)

    x = jax.random.normal(k_x, (BATCH, SEQ, DIM), dtype=jnp.float32)
    # Shapes match nn.LayerNorm(dim) and nn.MultiheadAttention(dim, num_heads, bias=False).
    ln_gamma = 1.0 + 0.1 * jax.random.normal(k_ln_g, (DIM,), dtype=jnp.float32)
    ln_beta = 0.1 * jax.random.normal(k_ln_b, (DIM,), dtype=jnp.float32)
    in_proj_weight = jax.random.normal(k_in, (3 * DIM, DIM), dtype=jnp.float32) / math.sqrt(DIM)
    out_proj_weight = jax.random.normal(k_out, (DIM, DIM), dtype=jnp.float32) / math.sqrt(DIM)

    out = mhsa_pallas(x, ln_gamma, ln_beta, in_proj_weight, out_proj_weight)
    out = jax.block_until_ready(out)

    ref = mhsa_reference(x, ln_gamma, ln_beta, in_proj_weight, out_proj_weight, NUM_HEADS)
    ref = jax.block_until_ready(ref)

    assert out.shape == (BATCH, SEQ, DIM)
    # Tolerance accounts for intentional bf16 MXU operands (f32 accumulation) and the
    # approximate EUP reciprocal in the softmax denominator; values are O(1).
    assert jnp.allclose(out, ref, atol=2e-2, rtol=2e-2), (
        f"max abs err {jnp.max(jnp.abs(out - ref))}"
    )
    print("KERNEL_OK")
</pallas_src>

<mosaic_0001>
module attributes {stable_mosaic.version = 11 : i64} {
  func.func @kernel(%arg0: memref<16x32xf32, #tpu.memory_space<vmem>>, %arg1: memref<1x32xf32, #tpu.memory_space<vmem>>, %arg2: memref<1x32xf32, #tpu.memory_space<vmem>>, %arg3: memref<16x16xf32, #tpu.memory_space<vmem>>, %arg4: memref<32x64xbf16, #tpu.memory_space<vmem>>, %arg5: memref<32x32xbf16, #tpu.memory_space<vmem>>, %arg6: memref<32x32xbf16, #tpu.memory_space<vmem>>, %arg7: memref<16x32xf32, #tpu.memory_space<vmem>>) attributes {dimension_semantics = [], scalar_prefetch = 0 : i64, scratch_operands = 0 : i64, tpu.core_type = #tpu.core_type<tc>} {
    %c0 = arith.constant 0 : index
    %c0_0 = arith.constant 0 : index
    %0 = vector.load %arg0[%c0, %c0_0] : memref<16x32xf32, #tpu.memory_space<vmem>>, vector<16x32xf32>
    %c0_1 = arith.constant 0 : index
    %c0_2 = arith.constant 0 : index
    %1 = vector.load %arg1[%c0_1, %c0_2] : memref<1x32xf32, #tpu.memory_space<vmem>>, vector<1x32xf32>
    %c0_3 = arith.constant 0 : index
    %c0_4 = arith.constant 0 : index
    %2 = vector.load %arg2[%c0_3, %c0_4] : memref<1x32xf32, #tpu.memory_space<vmem>>, vector<1x32xf32>
    %c0_5 = arith.constant 0 : index
    %c0_6 = arith.constant 0 : index
    %3 = vector.load %arg3[%c0_5, %c0_6] : memref<16x16xf32, #tpu.memory_space<vmem>>, vector<16x16xf32>
    %cst = arith.constant dense<0.000000e+00> : vector<16xf32>
    %4 = vector.multi_reduction <add>, %0, %cst [1] : vector<16x32xf32> to vector<16xf32>
    %5 = vector.shape_cast %4 : vector<16xf32> to vector<16x1xf32>
    %cst_7 = arith.constant 3.200000e+01 : f32
    %6 = vector.broadcast %cst_7 : f32 to vector<16x1xf32>
    %7 = arith.divf %5, %6 : vector<16x1xf32>
    %8 = vector.broadcast %7 : vector<16x1xf32> to vector<16x32xf32>
    %9 = arith.subf %0, %8 : vector<16x32xf32>
    %10 = arith.mulf %9, %9 : vector<16x32xf32>
    %cst_8 = arith.constant dense<0.000000e+00> : vector<16xf32>
    %11 = vector.multi_reduction <add>, %10, %cst_8 [1] : vector<16x32xf32> to vector<16xf32>
    %12 = vector.shape_cast %11 : vector<16xf32> to vector<16x1xf32>
    %cst_9 = arith.constant 3.200000e+01 : f32
    %13 = vector.broadcast %cst_9 : f32 to vector<16x1xf32>
    %14 = arith.divf %12, %13 : vector<16x1xf32>
    %15 = vector.broadcast %7 : vector<16x1xf32> to vector<16x32xf32>
    %16 = arith.subf %0, %15 : vector<16x32xf32>
    %cst_10 = arith.constant 9.99999974E-6 : f32
    %17 = vector.broadcast %cst_10 : f32 to vector<16x1xf32>
    %18 = arith.addf %14, %17 : vector<16x1xf32>
    %19 = math.rsqrt %18 : vector<16x1xf32>
    %20 = vector.broadcast %19 : vector<16x1xf32> to vector<16x32xf32>
    %21 = arith.mulf %16, %20 : vector<16x32xf32>
    %22 = vector.broadcast %1 : vector<1x32xf32> to vector<16x32xf32>
    %23 = arith.mulf %21, %22 : vector<16x32xf32>
    %24 = vector.broadcast %2 : vector<1x32xf32> to vector<16x32xf32>
    %25 = arith.addf %23, %24 : vector<16x32xf32>
    %26 = arith.truncf %25 : vector<16x32xf32> to vector<16x32xbf16>
    %27 = tpu.transpose %26, [1, 0] : vector<16x32xbf16> -> vector<32x16xbf16>
    %c0_11 = arith.constant 0 : index
    %c0_12 = arith.constant 0 : index
    %28 = vector.load %arg4[%c0_11, %c0_12] : memref<32x64xbf16, #tpu.memory_space<vmem>>, vector<32x64xbf16>
    %cst_13 = arith.constant dense<0.000000e+00> : vector<16x64xf32>
    %29 = tpu.matmul %26, %28, %cst_13 {dimension_numbers = #tpu.dot_dimension_numbers<[1], [0], [0], [1], [0, 0, 1, 1], [], []>} : vector<16x32xbf16>, vector<32x64xbf16>, vector<16x64xf32> -> vector<16x64xf32>
    %c0_14 = arith.constant 0 : index
    %c0_15 = arith.constant 0 : index
    %30 = vector.load %arg5[%c0_14, %c0_15] : memref<32x32xbf16, #tpu.memory_space<vmem>>, vector<32x32xbf16>
    %cst_16 = arith.constant dense<0.000000e+00> : vector<32x16xf32>
    %31 = tpu.matmul %30, %27, %cst_16 {dimension_numbers = #tpu.dot_dimension_numbers<[1], [0], [0], [1], [0, 0, 1, 1], [], []>} : vector<32x32xbf16>, vector<32x16xbf16>, vector<32x16xf32> -> vector<32x16xf32>
    %32 = arith.truncf %29 : vector<16x64xf32> to vector<16x64xbf16>
    %33 = arith.truncf %31 : vector<32x16xf32> to vector<32x16xbf16>
    %34 = vector.extract_strided_slice %32 {offsets = [0, 0], sizes = [16, 8], strides = [1, 1]} : vector<16x64xbf16> to vector<16x8xbf16>
    %35 = vector.extract_strided_slice %33 {offsets = [0, 0], sizes = [8, 16], strides = [1, 1]} : vector<32x16xbf16> to vector<8x16xbf16>
    %36 = vector.extract_strided_slice %32 {offsets = [0, 32], sizes = [16, 8], strides = [1, 1]} : vector<16x64xbf16> to vector<16x8xbf16>
    %cst_17 = arith.constant dense<0.000000e+00> : vector<16x16xf32>
    %37 = tpu.matmul %34, %35, %cst_17 {dimension_numbers = #tpu.dot_dimension_numbers<[1], [0], [0], [1], [0, 0, 1, 1], [], []>} : vector<16x8xbf16>, vector<8x16xbf16>, vector<16x16xf32> -> vector<16x16xf32>
    %38 = arith.addf %37, %3 : vector<16x16xf32>
    %cst_18 = arith.constant dense<0xFF800000> : vector<16xf32>
    %39 = vector.multi_reduction <maximumf>, %38, %cst_18 [1] : vector<16x16xf32> to vector<16xf32>
    %40 = vector.shape_cast %39 : vector<16xf32> to vector<16x1xf32>
    %41 = vector.broadcast %40 : vector<16x1xf32> to vector<16x16xf32>
    %42 = arith.subf %38, %41 : vector<16x16xf32>
    %43 = math.exp %42 : vector<16x16xf32>
    %cst_19 = arith.constant dense<0.000000e+00> : vector<16xf32>
    %44 = vector.multi_reduction <add>, %43, %cst_19 [1] : vector<16x16xf32> to vector<16xf32>
    %45 = vector.shape_cast %44 : vector<16xf32> to vector<16x1xf32>
    %46 = tpu.reciprocal %45 {approx = true} : vector<16x1xf32> -> vector<16x1xf32>
    %47 = vector.broadcast %46 : vector<16x1xf32> to vector<16x16xf32>
    %48 = arith.mulf %43, %47 : vector<16x16xf32>
    %49 = arith.truncf %48 : vector<16x16xf32> to vector<16x16xbf16>
    %cst_20 = arith.constant dense<0.000000e+00> : vector<16x8xf32>
    %50 = tpu.matmul %49, %36, %cst_20 {dimension_numbers = #tpu.dot_dimension_numbers<[1], [0], [0], [1], [0, 0, 1, 1], [], []>} : vector<16x16xbf16>, vector<16x8xbf16>, vector<16x8xf32> -> vector<16x8xf32>
    %51 = arith.truncf %50 : vector<16x8xf32> to vector<16x8xbf16>
    %52 = vector.extract_strided_slice %32 {offsets = [0, 8], sizes = [16, 8], strides = [1, 1]} : vector<16x64xbf16> to vector<16x8xbf16>
    %53 = vector.extract_strided_slice %33 {offsets = [8, 0], sizes = [8, 16], strides = [1, 1]} : vector<32x16xbf16> to vector<8x16xbf16>
    %54 = vector.extract_strided_slice %32 {offsets = [0, 40], sizes = [16, 8], strides = [1, 1]} : vector<16x64xbf16> to vector<16x8xbf16>
    %cst_21 = arith.constant dense<0.000000e+00> : vector<16x16xf32>
    %55 = tpu.matmul %52, %53, %cst_21 {dimension_numbers = #tpu.dot_dimension_numbers<[1], [0], [0], [1], [0, 0, 1, 1], [], []>} : vector<16x8xbf16>, vector<8x16xbf16>, vector<16x16xf32> -> vector<16x16xf32>
    %56 = arith.addf %55, %3 : vector<16x16xf32>
    %cst_22 = arith.constant dense<0xFF800000> : vector<16xf32>
    %57 = vector.multi_reduction <maximumf>, %56, %cst_22 [1] : vector<16x16xf32> to vector<16xf32>
    %58 = vector.shape_cast %57 : vector<16xf32> to vector<16x1xf32>
    %59 = vector.broadcast %58 : vector<16x1xf32> to vector<16x16xf32>
    %60 = arith.subf %56, %59 : vector<16x16xf32>
    %61 = math.exp %60 : vector<16x16xf32>
    %cst_23 = arith.constant dense<0.000000e+00> : vector<16xf32>
    %62 = vector.multi_reduction <add>, %61, %cst_23 [1] : vector<16x16xf32> to vector<16xf32>
    %63 = vector.shape_cast %62 : vector<16xf32> to vector<16x1xf32>
    %64 = tpu.reciprocal %63 {approx = true} : vector<16x1xf32> -> vector<16x1xf32>
    %65 = vector.broadcast %64 : vector<16x1xf32> to vector<16x16xf32>
    %66 = arith.mulf %61, %65 : vector<16x16xf32>
    %67 = arith.truncf %66 : vector<16x16xf32> to vector<16x16xbf16>
    %cst_24 = arith.constant dense<0.000000e+00> : vector<16x8xf32>
    %68 = tpu.matmul %67, %54, %cst_24 {dimension_numbers = #tpu.dot_dimension_numbers<[1], [0], [0], [1], [0, 0, 1, 1], [], []>} : vector<16x16xbf16>, vector<16x8xbf16>, vector<16x8xf32> -> vector<16x8xf32>
    %69 = arith.truncf %68 : vector<16x8xf32> to vector<16x8xbf16>
    %70 = vector.extract_strided_slice %32 {offsets = [0, 16], sizes = [16, 8], strides = [1, 1]} : vector<16x64xbf16> to vector<16x8xbf16>
    %71 = vector.extract_strided_slice %33 {offsets = [16, 0], sizes = [8, 16], strides = [1, 1]} : vector<32x16xbf16> to vector<8x16xbf16>
    %72 = vector.extract_strided_slice %32 {offsets = [0, 48], sizes = [16, 8], strides = [1, 1]} : vector<16x64xbf16> to vector<16x8xbf16>
    %cst_25 = arith.constant dense<0.000000e+00> : vector<16x16xf32>
    %73 = tpu.matmul %70, %71, %cst_25 {dimension_numbers = #tpu.dot_dimension_numbers<[1], [0], [0], [1], [0, 0, 1, 1], [], []>} : vector<16x8xbf16>, vector<8x16xbf16>, vector<16x16xf32> -> vector<16x16xf32>
    %74 = arith.addf %73, %3 : vector<16x16xf32>
    %cst_26 = arith.constant dense<0xFF800000> : vector<16xf32>
    %75 = vector.multi_reduction <maximumf>, %74, %cst_26 [1] : vector<16x16xf32> to vector<16xf32>
    %76 = vector.shape_cast %75 : vector<16xf32> to vector<16x1xf32>
    %77 = vector.broadcast %76 : vector<16x1xf32> to vector<16x16xf32>
    %78 = arith.subf %74, %77 : vector<16x16xf32>
    %79 = math.exp %78 : vector<16x16xf32>
    %cst_27 = arith.constant dense<0.000000e+00> : vector<16xf32>
    %80 = vector.multi_reduction <add>, %79, %cst_27 [1] : vector<16x16xf32> to vector<16xf32>
    %81 = vector.shape_cast %80 : vector<16xf32> to vector<16x1xf32>
    %82 = tpu.reciprocal %81 {approx = true} : vector<16x1xf32> -> vector<16x1xf32>
    %83 = vector.broadcast %82 : vector<16x1xf32> to vector<16x16xf32>
    %84 = arith.mulf %79, %83 : vector<16x16xf32>
    %85 = arith.truncf %84 : vector<16x16xf32> to vector<16x16xbf16>
    %cst_28 = arith.constant dense<0.000000e+00> : vector<16x8xf32>
    %86 = tpu.matmul %85, %72, %cst_28 {dimension_numbers = #tpu.dot_dimension_numbers<[1], [0], [0], [1], [0, 0, 1, 1], [], []>} : vector<16x16xbf16>, vector<16x8xbf16>, vector<16x8xf32> -> vector<16x8xf32>
    %87 = arith.truncf %86 : vector<16x8xf32> to vector<16x8xbf16>
    %88 = vector.extract_strided_slice %32 {offsets = [0, 24], sizes = [16, 8], strides = [1, 1]} : vector<16x64xbf16> to vector<16x8xbf16>
    %89 = vector.extract_strided_slice %33 {offsets = [24, 0], sizes = [8, 16], strides = [1, 1]} : vector<32x16xbf16> to vector<8x16xbf16>
    %90 = vector.extract_strided_slice %32 {offsets = [0, 56], sizes = [16, 8], strides = [1, 1]} : vector<16x64xbf16> to vector<16x8xbf16>
    %cst_29 = arith.constant dense<0.000000e+00> : vector<16x16xf32>
    %91 = tpu.matmul %88, %89, %cst_29 {dimension_numbers = #tpu.dot_dimension_numbers<[1], [0], [0], [1], [0, 0, 1, 1], [], []>} : vector<16x8xbf16>, vector<8x16xbf16>, vector<16x16xf32> -> vector<16x16xf32>
    %92 = arith.addf %91, %3 : vector<16x16xf32>
    %cst_30 = arith.constant dense<0xFF800000> : vector<16xf32>
    %93 = vector.multi_reduction <maximumf>, %92, %cst_30 [1] : vector<16x16xf32> to vector<16xf32>
    %94 = vector.shape_cast %93 : vector<16xf32> to vector<16x1xf32>
    %95 = vector.broadcast %94 : vector<16x1xf32> to vector<16x16xf32>
    %96 = arith.subf %92, %95 : vector<16x16xf32>
    %97 = math.exp %96 : vector<16x16xf32>
    %cst_31 = arith.constant dense<0.000000e+00> : vector<16xf32>
    %98 = vector.multi_reduction <add>, %97, %cst_31 [1] : vector<16x16xf32> to vector<16xf32>
    %99 = vector.shape_cast %98 : vector<16xf32> to vector<16x1xf32>
    %100 = tpu.reciprocal %99 {approx = true} : vector<16x1xf32> -> vector<16x1xf32>
    %101 = vector.broadcast %100 : vector<16x1xf32> to vector<16x16xf32>
    %102 = arith.mulf %97, %101 : vector<16x16xf32>
    %103 = arith.truncf %102 : vector<16x16xf32> to vector<16x16xbf16>
    %cst_32 = arith.constant dense<0.000000e+00> : vector<16x8xf32>
    %104 = tpu.matmul %103, %90, %cst_32 {dimension_numbers = #tpu.dot_dimension_numbers<[1], [0], [0], [1], [0, 0, 1, 1], [], []>} : vector<16x16xbf16>, vector<16x8xbf16>, vector<16x8xf32> -> vector<16x8xf32>
    %105 = arith.truncf %104 : vector<16x8xf32> to vector<16x8xbf16>
    %106 = tpu.concatenate %51, %69, %87, %105 in 1 : vector<16x8xbf16>, vector<16x8xbf16>, vector<16x8xbf16>, vector<16x8xbf16> -> vector<16x32xbf16>
    %c0_33 = arith.constant 0 : index
    %c0_34 = arith.constant 0 : index
    %107 = vector.load %arg6[%c0_33, %c0_34] : memref<32x32xbf16, #tpu.memory_space<vmem>>, vector<32x32xbf16>
    %cst_35 = arith.constant dense<0.000000e+00> : vector<16x32xf32>
    %108 = tpu.matmul %106, %107, %cst_35 {dimension_numbers = #tpu.dot_dimension_numbers<[1], [0], [0], [1], [0, 0, 1, 1], [], []>} : vector<16x32xbf16>, vector<32x32xbf16>, vector<16x32xf32> -> vector<16x32xf32>
    %c0_36 = arith.constant 0 : index
    %c0_37 = arith.constant 0 : index
    %109 = vector.load %arg7[%c0_36, %c0_37] : memref<16x32xf32, #tpu.memory_space<vmem>>, vector<16x32xf32>
    tpu.vector_store %arg7[%c0_36, %c0_37], %108 {strides = array<i32>} : memref<16x32xf32, #tpu.memory_space<vmem>>, vector<16x32xf32>,
    return
  }
}

</mosaic_0001>

<llo_original>
// kernel: tpu_custom_call.1
$region0: #{tpu_custom_call.1}
  #allocation0 [shape = 'u32[]', space=smem, size = 0x4, offset = 0x4, fixed_abs, tag = 'smem constant byte address 0x4 - core index']
  #allocation1 [shape = 'u32[144,128]{1,0:T(1,128)}', space=vmem, size = 0x12000, scoped, tag = 'internal scratch']
  %s0 = inlined_call_operand.hbm [shape: f32[16,32], index: 0, kind: input, shape index: {}]
  %s1 = inlined_call_operand.vmem [shape: f32[1,32], index: 1, kind: input, shape index: {}]
  %s2 = inlined_call_operand.vmem [shape: f32[1,32], index: 2, kind: input, shape index: {}]
  %s3 = inlined_call_operand.hbm [shape: f32[16,16], index: 3, kind: input, shape index: {}]
  %s4 = inlined_call_operand.hbm [shape: bf16[32,64], index: 4, kind: input, shape index: {}]
  %s5 = inlined_call_operand.vmem [shape: bf16[32,32], index: 5, kind: input, shape index: {}]
  %s6 = inlined_call_operand.hbm [shape: bf16[32,32], index: 6, kind: input, shape index: {}]
  %s7 = inlined_call_operand.hbm [shape: f32[16,32], index: 7, kind: output, shape index: {}]
  %s8 = sld [smem:[#allocation0]]
  $region54: #{tpu_custom_call.1} parent=0
    _
  %s10 = ssub.s32 1, %s8
  %s11 = scalar_select 0, %s10, %s8
  $region1: #{tpu_custom_call.1} parent=0
    #allocation2 [shape = 'u8[8192]{0}', space=vmem, size = 0x2000, scoped, tag = 'input window, operand 0, single buffered']
    #allocation3 [shape = 's32[1]{0}', space=sflag, size = 0x4, scoped, tag = 'scoped memory for tpu_custom_call.1']
    #allocation4 [shape = 's32[1]{0}', space=sflag, size = 0x4, scoped, tag = 'scoped memory for tpu_custom_call.1']
    #allocation5 [shape = 'u8[8192]{0}', space=vmem, size = 0x2000, scoped, tag = 'input window, operand 3, single buffered']
    #allocation6 [shape = 's32[1]{0}', space=sflag, size = 0x4, scoped, tag = 'scoped memory for tpu_custom_call.1']
    #allocation7 [shape = 'u8[8192]{0}', space=vmem, size = 0x2000, scoped, tag = 'input window, operand 4, single buffered']
    #allocation8 [shape = 'u8[8192]{0}', space=vmem, size = 0x2000, scoped, tag = 'input window, operand 6, single buffered']
    #allocation9 [shape = 's32[1]{0}', space=sflag, size = 0x4, scoped, tag = 'scoped memory for tpu_custom_call.1']
    #allocation10 [shape = 'u8[8192]{0}', space=vmem, size = 0x2000, scoped, tag = 'output window, operand 0, single buffered']
    %12 = vsyncpa [#allocation3], 0
    %13 = vsyncpa [#allocation6], 0
    %14 = vsyncpa [#allocation9], 0
    %15 = vsyncpa [#allocation4], 0
    // Predicated region
    $region2: #{tpu_custom_call.1} parent=1 // pred_check
      _
    $region3: #{tpu_custom_call.1} parent=1 // pred_check_branch
      %17 = sbr.rel (0) target = $region5
    $region4: #{tpu_custom_call.1} parent=1 // pred_region
      %s19 = ssub.s32 256, 256
      %20 = vsyncadd [#allocation3], %s19
      %s21 = sshll.u32 [#allocation2], 4
      %s22 = int_to_ptr.vmem [resolvable:$true] %s21
      %27 = dma.hbm_to_vmem [thread:$0]  %s0, 256, %s22, [#allocation3], 128, 128, 8
    $region5: #{tpu_custom_call.1} parent=1 // pred_fallthru
      _
    // Predicated region
    $region6: #{tpu_custom_call.1} parent=1 // pred_check
      _
    $region7: #{tpu_custom_call.1} parent=1 // pred_check_branch
      %29 = sbr.rel (0) target = $region9
    $region8: #{tpu_custom_call.1} parent=1 // pred_region
      _
    $region9: #{tpu_custom_call.1} parent=1 // pred_fallthru
      _
    // Predicated region
    $region10: #{tpu_custom_call.1} parent=1 // pred_check
      _
    $region11: #{tpu_custom_call.1} parent=1 // pred_check_branch
      %31 = sbr.rel (0) target = $region13
    $region12: #{tpu_custom_call.1} parent=1 // pred_region
      _
    $region13: #{tpu_custom_call.1} parent=1 // pred_fallthru
      _
    // Predicated region
    $region14: #{tpu_custom_call.1} parent=1 // pred_check
      _
    $region15: #{tpu_custom_call.1} parent=1 // pred_check_branch
      %33 = sbr.rel (0) target = $region17
    $region16: #{tpu_custom_call.1} parent=1 // pred_region
      %s35 = ssub.s32 256, 256
      %36 = vsyncadd [#allocation6], %s35
      %s37 = sshll.u32 [#allocation5], 4
      %s38 = int_to_ptr.vmem [resolvable:$true] %s37
      %43 = dma.hbm_to_vmem [thread:$0]  %s3, 256, %s38, [#allocation6], 128, 128, 8
    $region17: #{tpu_custom_call.1} parent=1 // pred_fallthru
      _
    // Predicated region
    $region18: #{tpu_custom_call.1} parent=1 // pred_check
      _
    $region19: #{tpu_custom_call.1} parent=1 // pred_check_branch
      %45 = sbr.rel (0) target = $region21
    $region20: #{tpu_custom_call.1} parent=1 // pred_region
      %s47 = ssub.s32 256, 256
      %48 = vsyncadd [#allocation6], %s47
      %s49 = sshll.u32 [#allocation7], 4
      %s50 = int_to_ptr.vmem [resolvable:$true] %s49
      %55 = dma.hbm_to_vmem [thread:$0]  %s4, 256, %s50, [#allocation6], 64, 64, 4
    $region21: #{tpu_custom_call.1} parent=1 // pred_fallthru
      _
    // Predicated region
    $region22: #{tpu_custom_call.1} parent=1 // pred_check
      _
    $region23: #{tpu_custom_call.1} parent=1 // pred_check_branch
      %57 = sbr.rel (0) target = $region25
    $region24: #{tpu_custom_call.1} parent=1 // pred_region
      _
    $region25: #{tpu_custom_call.1} parent=1 // pred_fallthru
      _
    // Predicated region
    $region26: #{tpu_custom_call.1} parent=1 // pred_check
      _
    $region27: #{tpu_custom_call.1} parent=1 // pred_check_branch
      %59 = sbr.rel (0) target = $region29
    $region28: #{tpu_custom_call.1} parent=1 // pred_region
      %s61 = ssub.s32 256, 256
      %62 = vsyncadd [#allocation9], %s61
      %s63 = sshll.u32 [#allocation8], 4
      %s64 = int_to_ptr.vmem [resolvable:$true] %s63
      %69 = dma.hbm_to_vmem [thread:$0]  %s6, 256, %s64, [#allocation9], 64, 64, 4
    $region29: #{tpu_custom_call.1} parent=1 // pred_fallthru
      _
    // Predicated region
    $region30: #{tpu_custom_call.1} parent=1 // pred_check
      _
    $region31: #{tpu_custom_call.1} parent=1 // pred_check_branch
      %71 = sbr.rel (0) target = $region33
    $region32: #{tpu_custom_call.1} parent=1 // pred_region
      %72 = dma.done [#allocation3], 256
    $region33: #{tpu_custom_call.1} parent=1 // pred_fallthru
      _
    // Predicated region
    $region34: #{tpu_custom_call.1} parent=1 // pred_check
      _
    $region35: #{tpu_custom_call.1} parent=1 // pred_check_branch
      %74 = sbr.rel (0) target = $region37
    $region36: #{tpu_custom_call.1} parent=1 // pred_region
      %75 = dma.done [#allocation6], 256
    $region37: #{tpu_custom_call.1} parent=1 // pred_fallthru
      _
    // Predicated region
    $region38: #{tpu_custom_call.1} parent=1 // pred_check
      _
    $region39: #{tpu_custom_call.1} parent=1 // pred_check_branch
      %77 = sbr.rel (0) target = $region41
    $region40: #{tpu_custom_call.1} parent=1 // pred_region
      %78 = dma.done [#allocation6], 256
    $region41: #{tpu_custom_call.1} parent=1 // pred_fallthru
      _
    // Predicated region
    $region42: #{tpu_custom_call.1} parent=1 // pred_check
      _
    $region43: #{tpu_custom_call.1} parent=1 // pred_check_branch
      %80 = sbr.rel (0) target = $region45
    $region44: #{tpu_custom_call.1} parent=1 // pred_region
      %81 = dma.done [#allocation9], 256
    $region45: #{tpu_custom_call.1} parent=1 // pred_fallthru
      _
    %v83 = vld [vmem:[#allocation2] sm:$0xff]
    %v84 = vld [vmem:[#allocation2 + $0x8] sm:$0xff]
    %v85 = vld [vmem:[%s1] sm:$0x1]
    %v86 = vld [vmem:[%s2] sm:$0x1]
    %v87 = vld [vmem:[#allocation5] sm:$0xff]
    %v88 = vld [vmem:[#allocation5 + $0x8] sm:$0xff]
    %vm89 = vcmask 261120
    %v90 = vsel %vm89, %v83, 0.0
    %91 = vadd.xlane.f32.xlu0 %v90
    %v92 = vpop.xlane.xlu0 %91
    %v93 = vsel %vm89, %v84, 0.0
    %94 = vadd.xlane.f32.xlu0 %v93
    %v95 = vpop.xlane.xlu0 %94
    %v96 = vrcp.pop 32.0
    %v97 = vmul.f32 %v92, %v96
    %v98 = vmul.f32 %v95, %v96
    %v99 = vsub.f32 %v83, %v97
    %v100 = vsub.f32 %v84, %v98
    %v101 = vmul.f32 %v99, %v99
    %v102 = vmul.f32 %v100, %v100
    %v103 = vsel %vm89, %v101, 0.0
    %104 = vadd.xlane.f32.xlu0 %v103
    %v105 = vpop.xlane.xlu0 %104
    %v106 = vsel %vm89, %v102, 0.0
    %107 = vadd.xlane.f32.xlu0 %v106
    %v108 = vpop.xlane.xlu0 %107
    %v109 = vmul.f32 %v105, %v96
    %v110 = vmul.f32 %v108, %v96
    %v111 = vadd.f32 %v109, 1e-05
    %v112 = vadd.f32 %v110, 1e-05
    %v113 = vrsqrt.pop %v111
    %v114 = vrsqrt.pop %v112
    %v115 = vmul.f32 %v99, %v113
    %v116 = vmul.f32 %v100, %v114
    %v118 = vlaneseq
    %v119 = vshrl.u32 %v118, 7
    %v120 = vsub.s32 0, %v119
    %v121 = vrot.slane %v85, %v120
    %v123 = vmul.f32 %v115, %v121
    %v124 = vmul.f32 %v116, %v121
    %v126 = vlaneseq
    %v127 = vshrl.u32 %v126, 7
    %v128 = vsub.s32 0, %v127
    %v129 = vrot.slane %v86, %v128
    %v131 = vadd.f32 %v123, %v129
    %v132 = vadd.f32 %v124, %v129
    %v133 = vpack.c.bf16 %v132, %v131
    %v134 = vld [vmem:[#allocation7] sm:$0xf]
    %v135 = vld [vmem:[#allocation7 + $0x4] sm:$0xf]
    %v136 = vld [vmem:[#allocation7 + $0x8] sm:$0xf]
    %v137 = vld [vmem:[#allocation7 + $0xc] sm:$0xf]
    %v142 = vunpack.c.l.b16 %v134
    %v143 = vunpack.c.l.b16 %v135
    %v144 = vunpack.c.l.b16 %v136
    %v145 = vunpack.c.l.b16 %v137
    %v146 = vpack.c.b16 %v143, %v142
    %v147 = vpack.c.b16 %v145, %v144
    %v151 = vsel %vm89, %v133, 0
    %153 = vmatprep.subr.bf16.mxu0 0
    %154 = vmatpush1.bf16.msra.mxu0 %v146
    %155 = vmatprep.subr.bf16.mxu0 0
    %156 = vmatpush1.bf16.msra.mxu0 %v147
    %157 = vmatprep.subr.bf16.mxu0 0
    %158 = vmatpush1.bf16.msra.mxu0 0
    %159 = vmatprep.subr.bf16.mxu0 0
    %160 = vmatpush1.bf16.msra.mxu0 0
    %161 = vmatprep.subr.bf16.mxu0 0
    %162 = vmatpush1.bf16.msra.mxu0 0
    %163 = vmatprep.subr.bf16.mxu0 0
    %164 = vmatpush1.bf16.msra.mxu0 0
    %165 = vmatprep.subr.bf16.mxu0 0
    %166 = vmatpush1.bf16.msra.mxu0 0
    %167 = vmatprep.subr.bf16.mxu0 0
    %168 = vmatpush1.bf16.msra.mxu0 0
    %169 = vmatprep.subr.bf16.mxu0 0
    %170 = vmatpush1.bf16.msra.mxu0 0
    %171 = vmatprep.subr.bf16.mxu0 0
    %172 = vmatpush1.bf16.msra.mxu0 0
    %173 = vmatprep.subr.bf16.mxu0 0
    %174 = vmatpush1.bf16.msra.mxu0 0
    %175 = vmatprep.subr.bf16.mxu0 0
    %176 = vmatpush1.bf16.msra.mxu0 0
    %177 = vmatprep.subr.bf16.mxu0 0
    %178 = vmatpush1.bf16.msra.mxu0 0
    %179 = vmatprep.subr.bf16.mxu0 0
    %180 = vmatpush1.bf16.msra.mxu0 0
    %181 = vmatprep.subr.bf16.mxu0 0
    %182 = vmatpush1.bf16.msra.mxu0 0
    %183 = vmatprep.subr.bf16.mxu0 0
    %184 = vmatpush1.bf16.msra.mxu0 0
    %185 = vmatprep.mubr.bf16.mxu0 0
    %186 = vmatmul.mubr.bf16.gmra.mrb[0].mxu0 %v151
    %v187 = vpop.f32.mrb[0].mxu0
    %v188 = vadd.f32 0.0, %v187
    %v189 = vpop.f32.mrb[0].mxu0
    %v190 = vpop.f32.mrb[0].mxu0
    %v191 = vadd.f32 0.0, %v190
    %v192 = vpop.f32.mrb[0].mxu0
    %193 = vdwg.mxu0
    %v194 = vld [vmem:[%s5] sm:$0xf]
    %v195 = vld [vmem:[%s5 + $0x4] sm:$0xf]
    %v196 = vld [vmem:[%s5 + $0x8] sm:$0xf]
    %v197 = vld [vmem:[%s5 + $0xc] sm:$0xf]
    %v202 = vunpack.c.l.b16 %v194
    %v203 = vunpack.c.l.b16 %v195
    %v204 = vunpack.c.l.b16 %v196
    %v205 = vunpack.c.l.b16 %v197
    %v206 = vpack.c.b16 %v203, %v202
    %v207 = vpack.c.b16 %v205, %v204
    %v209 = vsel %vm89, %v206, 0
    %v212 = vsel %vm89, %v207, 0
    %214 = vmatprep.subr.bf16.mxu0 0
    %215 = vmatpush1.bf16.xpose.msra.mxu0 %v151
    %216 = vmatprep.subr.bf16.mxu0 0
    %217 = vmatpush1.bf16.xpose.msra.mxu0 0
    %218 = vmatprep.subr.bf16.mxu0 0
    %219 = vmatpush1.bf16.xpose.msra.mxu0 0
    %220 = vmatprep.subr.bf16.mxu0 0
    %221 = vmatpush1.bf16.xpose.msra.mxu0 0
    %222 = vmatprep.subr.bf16.mxu0 0
    %223 = vmatpush1.bf16.xpose.msra.mxu0 0
    %224 = vmatprep.subr.bf16.mxu0 0
    %225 = vmatpush1.bf16.xpose.msra.mxu0 0
    %226 = vmatprep.subr.bf16.mxu0 0
    %227 = vmatpush1.bf16.xpose.msra.mxu0 0
    %228 = vmatprep.subr.bf16.mxu0 0
    %229 = vmatpush1.bf16.xpose.msra.mxu0 0
    %230 = vmatprep.subr.bf16.mxu0 0
    %231 = vmatpush1.bf16.xpose.msra.mxu0 0
    %232 = vmatprep.subr.bf16.mxu0 0
    %233 = vmatpush1.bf16.xpose.msra.mxu0 0
    %234 = vmatprep.subr.bf16.mxu0 0
    %235 = vmatpush1.bf16.xpose.msra.mxu0 0
    %236 = vmatprep.subr.bf16.mxu0 0
    %237 = vmatpush1.bf16.xpose.msra.mxu0 0
    %238 = vmatprep.subr.bf16.mxu0 0
    %239 = vmatpush1.bf16.xpose.msra.mxu0 0
    %240 = vmatprep.subr.bf16.mxu0 0
    %241 = vmatpush1.bf16.xpose.msra.mxu0 0
    %242 = vmatprep.subr.bf16.mxu0 0
    %243 = vmatpush1.bf16.xpose.msra.mxu0 0
    %244 = vmatprep.subr.bf16.mxu0 0
    %245 = vmatpush1.bf16.xpose.msra.mxu0 0
    %246 = vmatprep.mubr.bf16.mxu0 0
    %247 = vmatmul.mubr.bf16.gmra.mrb[0].mxu0 %v209
    %v248 = vpop.f32.mrb[0].mxu0
    %v249 = vadd.f32 0.0, %v248
    %v250 = vpop.f32.mrb[0].mxu0
    %v251 = vpop.f32.mrb[0].mxu0
    %v252 = vadd.f32 0.0, %v251
    %v253 = vpop.f32.mrb[0].mxu0
    %254 = vmatprep.mubr.bf16.mxu0 0
    %255 = vmatmul.mubr.bf16.gmra.mrb[0].mxu0 %v212
    %v256 = vpop.f32.mrb[0].mxu0
    %v257 = vadd.f32 0.0, %v256
    %v258 = vpop.f32.mrb[0].mxu0
    %v259 = vpop.f32.mrb[0].mxu0
    %v260 = vadd.f32 0.0, %v259
    %v261 = vpop.f32.mrb[0].mxu0
    %262 = vdwg.mxu0
    %v263 = vpack.c.bf16 %v191, %v188
    %v264 = vpack.c.bf16 %v252, %v249
    %v265 = vpack.c.bf16 %v260, %v257
    %vm266 = vcmask 64512
    %v268 = vsel %vm266, %v263, 0
    %vm270 = vcmask 1043456
    %v272 = vsel %vm270, %v264, 0
    %274 = vmatprep.subr.bf16.mxu0 0
    %275 = vmatpush1.bf16.msra.mxu0 %v272
    %276 = vmatprep.subr.bf16.mxu0 0
    %277 = vmatpush1.bf16.msra.mxu0 0
    %278 = vmatprep.subr.bf16.mxu0 0
    %279 = vmatpush1.bf16.msra.mxu0 0
    %280 = vmatprep.subr.bf16.mxu0 0
    %281 = vmatpush1.bf16.msra.mxu0 0
    %282 = vmatprep.subr.bf16.mxu0 0
    %283 = vmatpush1.bf16.msra.mxu0 0
    %284 = vmatprep.subr.bf16.mxu0 0
    %285 = vmatpush1.bf16.msra.mxu0 0
    %286 = vmatprep.subr.bf16.mxu0 0
    %287 = vmatpush1.bf16.msra.mxu0 0
    %288 = vmatprep.subr.bf16.mxu0 0
    %289 = vmatpush1.bf16.msra.mxu0 0
    %290 = vmatprep.subr.bf16.mxu0 0
    %291 = vmatpush1.bf16.msra.mxu0 0
    %292 = vmatprep.subr.bf16.mxu0 0
    %293 = vmatpush1.bf16.msra.mxu0 0
    %294 = vmatprep.subr.bf16.mxu0 0
    %295 = vmatpush1.bf16.msra.mxu0 0
    %296 = vmatprep.subr.bf16.mxu0 0
    %297 = vmatpush1.bf16.msra.mxu0 0
    %298 = vmatprep.subr.bf16.mxu0 0
    %299 = vmatpush1.bf16.msra.mxu0 0
    %300 = vmatprep.subr.bf16.mxu0 0
    %301 = vmatpush1.bf16.msra.mxu0 0
    %302 = vmatprep.subr.bf16.mxu0 0
    %303 = vmatpush1.bf16.msra.mxu0 0
    %304 = vmatprep.subr.bf16.mxu0 0
    %305 = vmatpush1.bf16.msra.mxu0 0
    %306 = vmatprep.mubr.bf16.mxu0 0
    %307 = vmatmul.mubr.bf16.gmra.mrb[0].mxu0 %v268
    %v308 = vpop.f32.mrb[0].mxu0
    %v309 = vadd.f32 %v87, %v308
    %v310 = vpop.f32.mrb[0].mxu0
    %v311 = vpop.f32.mrb[0].mxu0
    %v312 = vadd.f32 %v88, %v311
    %v313 = vpop.f32.mrb[0].mxu0
    %314 = vdwg.mxu0
    %vm315 = vcmask 130048
    %v316 = vsel %vm315, %v309, -inf
    %317 = vmax.xlane.f32.xlu0 %v316
    %v318 = vpop.xlane.xlu0 %317
    %v319 = vsel %vm315, %v312, -inf
    %320 = vmax.xlane.f32.xlu0 %v319
    %v321 = vpop.xlane.xlu0 %320
    %v322 = vsub.f32 %v309, %v318
    %v323 = vsub.f32 %v312, %v321
    %v324 = vmul.f32 %v322, 1.442695
    %v325 = vpow.pop %v324
    %v326 = vmul.f32 %v323, 1.442695
    %v327 = vpow.pop %v326
    %v328 = vsel %vm315, %v325, 0.0
    %329 = vadd.xlane.f32.xlu0 %v328
    %v330 = vpop.xlane.xlu0 %329
    %v331 = vsel %vm315, %v327, 0.0
    %332 = vadd.xlane.f32.xlu0 %v331
    %v333 = vpop.xlane.xlu0 %332
    %v334 = vrcp.pop %v330
    %v335 = vrcp.pop %v333
    %v336 = vmul.f32 %v325, %v334
    %v337 = vmul.f32 %v327, %v335
    %v338 = vpack.c.bf16 %v337, %v336
    %340 = vrot.lane.b32.xlu0 %v263, 96
    %v341 = vpop.permute.xlu0 %340
    %v344 = vsel %vm315, %v338, 0
    %346 = vmatprep.subr.bf16.mxu0 0
    %347 = vmatpush1.bf16.msra.mxu0 %v341
    %348 = vmatprep.subr.bf16.mxu0 0
    %349 = vmatpush1.bf16.msra.mxu0 0
    %350 = vmatprep.subr.bf16.mxu0 0
    %351 = vmatpush1.bf16.msra.mxu0 0
    %352 = vmatprep.subr.bf16.mxu0 0
    %353 = vmatpush1.bf16.msra.mxu0 0
    %354 = vmatprep.subr.bf16.mxu0 0
    %355 = vmatpush1.bf16.msra.mxu0 0
    %356 = vmatprep.subr.bf16.mxu0 0
    %357 = vmatpush1.bf16.msra.mxu0 0
    %358 = vmatprep.subr.bf16.mxu0 0
    %359 = vmatpush1.bf16.msra.mxu0 0
    %360 = vmatprep.subr.bf16.mxu0 0
    %361 = vmatpush1.bf16.msra.mxu0 0
    %362 = vmatprep.subr.bf16.mxu0 0
    %363 = vmatpush1.bf16.msra.mxu0 0
    %364 = vmatprep.subr.bf16.mxu0 0
    %365 = vmatpush1.bf16.msra.mxu0 0
    %366 = vmatprep.subr.bf16.mxu0 0
    %367 = vmatpush1.bf16.msra.mxu0 0
    %368 = vmatprep.subr.bf16.mxu0 0
    %369 = vmatpush1.bf16.msra.mxu0 0
    %370 = vmatprep.subr.bf16.mxu0 0
    %371 = vmatpush1.bf16.msra.mxu0 0
    %372 = vmatprep.subr.bf16.mxu0 0
    %373 = vmatpush1.bf16.msra.mxu0 0
    %374 = vmatprep.subr.bf16.mxu0 0
    %375 = vmatpush1.bf16.msra.mxu0 0
    %376 = vmatprep.subr.bf16.mxu0 0
    %377 = vmatpush1.bf16.msra.mxu0 0
    %378 = vmatprep.mubr.bf16.mxu0 0
    %379 = vmatmul.mubr.bf16.gmra.mrb[0].mxu0 %v344
    %v380 = vpop.f32.mrb[0].mxu0
    %v381 = vadd.f32 0.0, %v380
    %v382 = vpop.f32.mrb[0].mxu0
    %v383 = vpop.f32.mrb[0].mxu0
    %v384 = vadd.f32 0.0, %v383
    %v385 = vpop.f32.mrb[0].mxu0
    %386 = vdwg.mxu0
    %v387 = vpack.c.bf16 %v384, %v381
    %388 = vrot.lane.b32.xlu0 %v263, 120
    %v389 = vpop.permute.xlu0 %388
    %v391 = vrot.slane %v264, 4
    %v393 = vsel %vm266, %v389, 0
    %v396 = vsel %vm270, %v391, 0
    %398 = vmatprep.subr.bf16.mxu0 0
    %399 = vmatpush1.bf16.msra.mxu0 %v396
    %400 = vmatprep.subr.bf16.mxu0 0
    %401 = vmatpush1.bf16.msra.mxu0 0
    %402 = vmatprep.subr.bf16.mxu0 0
    %403 = vmatpush1.bf16.msra.mxu0 0
    %404 = vmatprep.subr.bf16.mxu0 0
    %405 = vmatpush1.bf16.msra.mxu0 0
    %406 = vmatprep.subr.bf16.mxu0 0
    %407 = vmatpush1.bf16.msra.mxu0 0
    %408 = vmatprep.subr.bf16.mxu0 0
    %409 = vmatpush1.bf16.msra.mxu0 0
    %410 = vmatprep.subr.bf16.mxu0 0
    %411 = vmatpush1.bf16.msra.mxu0 0
    %412 = vmatprep.subr.bf16.mxu0 0
    %413 = vmatpush1.bf16.msra.mxu0 0
    %414 = vmatprep.subr.bf16.mxu0 0
    %415 = vmatpush1.bf16.msra.mxu0 0
    %416 = vmatprep.subr.bf16.mxu0 0
    %417 = vmatpush1.bf16.msra.mxu0 0
    %418 = vmatprep.subr.bf16.mxu0 0
    %419 = vmatpush1.bf16.msra.mxu0 0
    %420 = vmatprep.subr.bf16.mxu0 0
    %421 = vmatpush1.bf16.msra.mxu0 0
    %422 = vmatprep.subr.bf16.mxu0 0
    %423 = vmatpush1.bf16.msra.mxu0 0
    %424 = vmatprep.subr.bf16.mxu0 0
    %425 = vmatpush1.bf16.msra.mxu0 0
    %426 = vmatprep.subr.bf16.mxu0 0
    %427 = vmatpush1.bf16.msra.mxu0 0
    %428 = vmatprep.subr.bf16.mxu0 0
    %429 = vmatpush1.bf16.msra.mxu0 0
    %430 = vmatprep.mubr.bf16.mxu0 0
    %431 = vmatmul.mubr.bf16.gmra.mrb[0].mxu0 %v393
    %v432 = vpop.f32.mrb[0].mxu0
    %v433 = vadd.f32 %v87, %v432
    %v434 = vpop.f32.mrb[0].mxu0
    %v435 = vpop.f32.mrb[0].mxu0
    %v436 = vadd.f32 %v88, %v435
    %v437 = vpop.f32.mrb[0].mxu0
    %438 = vdwg.mxu0
    %v439 = vsel %vm315, %v433, -inf
    %440 = vmax.xlane.f32.xlu0 %v439
    %v441 = vpop.xlane.xlu0 %440
    %v442 = vsel %vm315, %v436, -inf
    %443 = vmax.xlane.f32.xlu0 %v442
    %v444 = vpop.xlane.xlu0 %443
    %v445 = vsub.f32 %v433, %v441
    %v446 = vsub.f32 %v436, %v444
    %v447 = vmul.f32 %v445, 1.442695
    %v448 = vpow.pop %v447
    %v449 = vmul.f32 %v446, 1.442695
    %v450 = vpow.pop %v449
    %v451 = vsel %vm315, %v448, 0.0
    %452 = vadd.xlane.f32.xlu0 %v451
    %v453 = vpop.xlane.xlu0 %452
    %v454 = vsel %vm315, %v450, 0.0
    %455 = vadd.xlane.f32.xlu0 %v454
    %v456 = vpop.xlane.xlu0 %455
    %v457 = vrcp.pop %v453
    %v458 = vrcp.pop %v456
    %v459 = vmul.f32 %v448, %v457
    %v460 = vmul.f32 %v450, %v458
    %v461 = vpack.c.bf16 %v460, %v459
    %462 = vrot.lane.b32.xlu0 %v263, 88
    %v463 = vpop.permute.xlu0 %462
    %v466 = vsel %vm315, %v461, 0
    %468 = vmatprep.subr.bf16.mxu0 0
    %469 = vmatpush1.bf16.msra.mxu0 %v463
    %470 = vmatprep.subr.bf16.mxu0 0
    %471 = vmatpush1.bf16.msra.mxu0 0
    %472 = vmatprep.subr.bf16.mxu0 0
    %473 = vmatpush1.bf16.msra.mxu0 0
    %474 = vmatprep.subr.bf16.mxu0 0
    %475 = vmatpush1.bf16.msra.mxu0 0
    %476 = vmatprep.subr.bf16.mxu0 0
    %477 = vmatpush1.bf16.msra.mxu0 0
    %478 = vmatprep.subr.bf16.mxu0 0
    %479 = vmatpush1.bf16.msra.mxu0 0
    %480 = vmatprep.subr.bf16.mxu0 0
    %481 = vmatpush1.bf16.msra.mxu0 0
    %482 = vmatprep.subr.bf16.mxu0 0
    %483 = vmatpush1.bf16.msra.mxu0 0
    %484 = vmatprep.subr.bf16.mxu0 0
    %485 = vmatpush1.bf16.msra.mxu0 0
    %486 = vmatprep.subr.bf16.mxu0 0
    %487 = vmatpush1.bf16.msra.mxu0 0
    %488 = vmatprep.subr.bf16.mxu0 0
    %489 = vmatpush1.bf16.msra.mxu0 0
    %490 = vmatprep.subr.bf16.mxu0 0
    %491 = vmatpush1.bf16.msra.mxu0 0
    %492 = vmatprep.subr.bf16.mxu0 0
    %493 = vmatpush1.bf16.msra.mxu0 0
    %494 = vmatprep.subr.bf16.mxu0 0
    %495 = vmatpush1.bf16.msra.mxu0 0
    %496 = vmatprep.subr.bf16.mxu0 0
    %497 = vmatpush1.bf16.msra.mxu0 0
    %498 = vmatprep.subr.bf16.mxu0 0
    %499 = vmatpush1.bf16.msra.mxu0 0
    %500 = vmatprep.mubr.bf16.mxu0 0
    %501 = vmatmul.mubr.bf16.gmra.mrb[0].mxu0 %v466
    %v502 = vpop.f32.mrb[0].mxu0
    %v503 = vadd.f32 0.0, %v502
    %v504 = vpop.f32.mrb[0].mxu0
    %v505 = vpop.f32.mrb[0].mxu0
    %v506 = vadd.f32 0.0, %v505
    %v507 = vpop.f32.mrb[0].mxu0
    %508 = vdwg.mxu0
    %v509 = vpack.c.bf16 %v506, %v503
    %510 = vrot.lane.b32.xlu0 %v263, 112
    %v511 = vpop.permute.xlu0 %510
    %v513 = vsel %vm266, %v511, 0
    %v516 = vsel %vm270, %v265, 0
    %518 = vmatprep.subr.bf16.mxu0 0
    %519 = vmatpush1.bf16.msra.mxu0 %v516
    %520 = vmatprep.subr.bf16.mxu0 0
    %521 = vmatpush1.bf16.msra.mxu0 0
    %522 = vmatprep.subr.bf16.mxu0 0
    %523 = vmatpush1.bf16.msra.mxu0 0
    %524 = vmatprep.subr.bf16.mxu0 0
    %525 = vmatpush1.bf16.msra.mxu0 0
    %526 = vmatprep.subr.bf16.mxu0 0
    %527 = vmatpush1.bf16.msra.mxu0 0
    %528 = vmatprep.subr.bf16.mxu0 0
    %529 = vmatpush1.bf16.msra.mxu0 0
    %530 = vmatprep.subr.bf16.mxu0 0
    %531 = vmatpush1.bf16.msra.mxu0 0
    %532 = vmatprep.subr.bf16.mxu0 0
    %533 = vmatpush1.bf16.msra.mxu0 0
    %534 = vmatprep.subr.bf16.mxu0 0
    %535 = vmatpush1.bf16.msra.mxu0 0
    %536 = vmatprep.subr.bf16.mxu0 0
    %537 = vmatpush1.bf16.msra.mxu0 0
    %538 = vmatprep.subr.bf16.mxu0 0
    %539 = vmatpush1.bf16.msra.mxu0 0
    %540 = vmatprep.subr.bf16.mxu0 0
    %541 = vmatpush1.bf16.msra.mxu0 0
    %542 = vmatprep.subr.bf16.mxu0 0
    %543 = vmatpush1.bf16.msra.mxu0 0
    %544 = vmatprep.subr.bf16.mxu0 0
    %545 = vmatpush1.bf16.msra.mxu0 0
    %546 = vmatprep.subr.bf16.mxu0 0
    %547 = vmatpush1.bf16.msra.mxu0 0
    %548 = vmatprep.subr.bf16.mxu0 0
    %549 = vmatpush1.bf16.msra.mxu0 0
    %550 = vmatprep.mubr.bf16.mxu0 0
    %551 = vmatmul.mubr.bf16.gmra.mrb[0].mxu0 %v513
    %v552 = vpop.f32.mrb[0].mxu0
    %v553 = vadd.f32 %v87, %v552
    %v554 = vpop.f32.mrb[0].mxu0
    %v555 = vpop.f32.mrb[0].mxu0
    %v556 = vadd.f32 %v88, %v555
    %v557 = vpop.f32.mrb[0].mxu0
    %558 = vdwg.mxu0
    %v559 = vsel %vm315, %v553, -inf
    %560 = vmax.xlane.f32.xlu0 %v559
    %v561 = vpop.xlane.xlu0 %560
    %v562 = vsel %vm315, %v556, -inf
    %563 = vmax.xlane.f32.xlu0 %v562
    %v564 = vpop.xlane.xlu0 %563
    %v565 = vsub.f32 %v553, %v561
    %v566 = vsub.f32 %v556, %v564
    %v567 = vmul.f32 %v565, 1.442695
    %v568 = vpow.pop %v567
    %v569 = vmul.f32 %v566, 1.442695
    %v570 = vpow.pop %v569
    %v571 = vsel %vm315, %v568, 0.0
    %572 = vadd.xlane.f32.xlu0 %v571
    %v573 = vpop.xlane.xlu0 %572
    %v574 = vsel %vm315, %v570, 0.0
    %575 = vadd.xlane.f32.xlu0 %v574
    %v576 = vpop.xlane.xlu0 %575
    %v577 = vrcp.pop %v573
    %v578 = vrcp.pop %v576
    %v579 = vmul.f32 %v568, %v577
    %v580 = vmul.f32 %v570, %v578
    %v581 = vpack.c.bf16 %v580, %v579
    %582 = vrot.lane.b32.xlu0 %v263, 80
    %v583 = vpop.permute.xlu0 %582
    %v586 = vsel %vm315, %v581, 0
    %588 = vmatprep.subr.bf16.mxu0 0
    %589 = vmatpush1.bf16.msra.mxu0 %v583
    %590 = vmatprep.subr.bf16.mxu0 0
    %591 = vmatpush1.bf16.msra.mxu0 0
    %592 = vmatprep.subr.bf16.mxu0 0
    %593 = vmatpush1.bf16.msra.mxu0 0
    %594 = vmatprep.subr.bf16.mxu0 0
    %595 = vmatpush1.bf16.msra.mxu0 0
    %596 = vmatprep.subr.bf16.mxu0 0
    %597 = vmatpush1.bf16.msra.mxu0 0
    %598 = vmatprep.subr.bf16.mxu0 0
    %599 = vmatpush1.bf16.msra.mxu0 0
    %600 = vmatprep.subr.bf16.mxu0 0
    %601 = vmatpush1.bf16.msra.mxu0 0
    %602 = vmatprep.subr.bf16.mxu0 0
    %603 = vmatpush1.bf16.msra.mxu0 0
    %604 = vmatprep.subr.bf16.mxu0 0
    %605 = vmatpush1.bf16.msra.mxu0 0
    %606 = vmatprep.subr.bf16.mxu0 0
    %607 = vmatpush1.bf16.msra.mxu0 0
    %608 = vmatprep.subr.bf16.mxu0 0
    %609 = vmatpush1.bf16.msra.mxu0 0
    %610 = vmatprep.subr.bf16.mxu0 0
    %611 = vmatpush1.bf16.msra.mxu0 0
    %612 = vmatprep.subr.bf16.mxu0 0
    %613 = vmatpush1.bf16.msra.mxu0 0
    %614 = vmatprep.subr.bf16.mxu0 0
    %615 = vmatpush1.bf16.msra.mxu0 0
    %616 = vmatprep.subr.bf16.mxu0 0
    %617 = vmatpush1.bf16.msra.mxu0 0
    %618 = vmatprep.subr.bf16.mxu0 0
    %619 = vmatpush1.bf16.msra.mxu0 0
    %620 = vmatprep.mubr.bf16.mxu0 0
    %621 = vmatmul.mubr.bf16.gmra.mrb[0].mxu0 %v586
    %v622 = vpop.f32.mrb[0].mxu0
    %v623 = vadd.f32 0.0, %v622
    %v624 = vpop.f32.mrb[0].mxu0
    %v625 = vpop.f32.mrb[0].mxu0
    %v626 = vadd.f32 0.0, %v625
    %v627 = vpop.f32.mrb[0].mxu0
    %628 = vdwg.mxu0
    %v629 = vpack.c.bf16 %v626, %v623
    %630 = vrot.lane.b32.xlu0 %v263, 104
    %v631 = vpop.permute.xlu0 %630
    %v633 = vrot.slane %v265, 4
    %v635 = vsel %vm266, %v631, 0
    %v638 = vsel %vm270, %v633, 0
    %640 = vmatprep.subr.bf16.mxu0 0
    %641 = vmatpush1.bf16.msra.mxu0 %v638
    %642 = vmatprep.subr.bf16.mxu0 0
    %643 = vmatpush1.bf16.msra.mxu0 0
    %644 = vmatprep.subr.bf16.mxu0 0
    %645 = vmatpush1.bf16.msra.mxu0 0
    %646 = vmatprep.subr.bf16.mxu0 0
    %647 = vmatpush1.bf16.msra.mxu0 0
    %648 = vmatprep.subr.bf16.mxu0 0
    %649 = vmatpush1.bf16.msra.mxu0 0
    %650 = vmatprep.subr.bf16.mxu0 0
    %651 = vmatpush1.bf16.msra.mxu0 0
    %652 = vmatprep.subr.bf16.mxu0 0
    %653 = vmatpush1.bf16.msra.mxu0 0
    %654 = vmatprep.subr.bf16.mxu0 0
    %655 = vmatpush1.bf16.msra.mxu0 0
    %656 = vmatprep.subr.bf16.mxu0 0
    %657 = vmatpush1.bf16.msra.mxu0 0
    %658 = vmatprep.subr.bf16.mxu0 0
    %659 = vmatpush1.bf16.msra.mxu0 0
    %660 = vmatprep.subr.bf16.mxu0 0
    %661 = vmatpush1.bf16.msra.mxu0 0
    %662 = vmatprep.subr.bf16.mxu0 0
    %663 = vmatpush1.bf16.msra.mxu0 0
    %664 = vmatprep.subr.bf16.mxu0 0
    %665 = vmatpush1.bf16.msra.mxu0 0
    %666 = vmatprep.subr.bf16.mxu0 0
    %667 = vmatpush1.bf16.msra.mxu0 0
    %668 = vmatprep.subr.bf16.mxu0 0
    %669 = vmatpush1.bf16.msra.mxu0 0
    %670 = vmatprep.subr.bf16.mxu0 0
    %671 = vmatpush1.bf16.msra.mxu0 0
    %672 = vmatprep.mubr.bf16.mxu0 0
    %673 = vmatmul.mubr.bf16.gmra.mrb[0].mxu0 %v635
    %v674 = vpop.f32.mrb[0].mxu0
    %v675 = vadd.f32 %v87, %v674
    %v676 = vpop.f32.mrb[0].mxu0
    %v677 = vpop.f32.mrb[0].mxu0
    %v678 = vadd.f32 %v88, %v677
    %v679 = vpop.f32.mrb[0].mxu0
    %680 = vdwg.mxu0
    %v681 = vsel %vm315, %v675, -inf
    %682 = vmax.xlane.f32.xlu0 %v681
    %v683 = vpop.xlane.xlu0 %682
    %v684 = vsel %vm315, %v678, -inf
    %685 = vmax.xlane.f32.xlu0 %v684
    %v686 = vpop.xlane.xlu0 %685
    %v687 = vsub.f32 %v675, %v683
    %v688 = vsub.f32 %v678, %v686
    %v689 = vmul.f32 %v687, 1.442695
    %v690 = vpow.pop %v689
    %v691 = vmul.f32 %v688, 1.442695
    %v692 = vpow.pop %v691
    %v693 = vsel %vm315, %v690, 0.0
    %694 = vadd.xlane.f32.xlu0 %v693
    %v695 = vpop.xlane.xlu0 %694
    %v696 = vsel %vm315, %v692, 0.0
    %697 = vadd.xlane.f32.xlu0 %v696
    %v698 = vpop.xlane.xlu0 %697
    %v699 = vrcp.pop %v695
    %v700 = vrcp.pop %v698
    %v701 = vmul.f32 %v690, %v699
    %v702 = vmul.f32 %v692, %v700
    %v703 = vpack.c.bf16 %v702, %v701
    %704 = vrot.lane.b32.xlu0 %v263, 72
    %v705 = vpop.permute.xlu0 %704
    %v708 = vsel %vm315, %v703, 0
    %710 = vmatprep.subr.bf16.mxu0 0
    %711 = vmatpush1.bf16.msra.mxu0 %v705
    %712 = vmatprep.subr.bf16.mxu0 0
    %713 = vmatpush1.bf16.msra.mxu0 0
    %714 = vmatprep.subr.bf16.mxu0 0
    %715 = vmatpush1.bf16.msra.mxu0 0
    %716 = vmatprep.subr.bf16.mxu0 0
    %717 = vmatpush1.bf16.msra.mxu0 0
    %718 = vmatprep.subr.bf16.mxu0 0
    %719 = vmatpush1.bf16.msra.mxu0 0
    %720 = vmatprep.subr.bf16.mxu0 0
    %721 = vmatpush1.bf16.msra.mxu0 0
    %722 = vmatprep.subr.bf16.mxu0 0
    %723 = vmatpush1.bf16.msra.mxu0 0
    %724 = vmatprep.subr.bf16.mxu0 0
    %725 = vmatpush1.bf16.msra.mxu0 0
    %726 = vmatprep.subr.bf16.mxu0 0
    %727 = vmatpush1.bf16.msra.mxu0 0
    %728 = vmatprep.subr.bf16.mxu0 0
    %729 = vmatpush1.bf16.msra.mxu0 0
    %730 = vmatprep.subr.bf16.mxu0 0
    %731 = vmatpush1.bf16.msra.mxu0 0
    %732 = vmatprep.subr.bf16.mxu0 0
    %733 = vmatpush1.bf16.msra.mxu0 0
    %734 = vmatprep.subr.bf16.mxu0 0
    %735 = vmatpush1.bf16.msra.mxu0 0
    %736 = vmatprep.subr.bf16.mxu0 0
    %737 = vmatpush1.bf16.msra.mxu0 0
    %738 = vmatprep.subr.bf16.mxu0 0
    %739 = vmatpush1.bf16.msra.mxu0 0
    %740 = vmatprep.subr.bf16.mxu0 0
    %741 = vmatpush1.bf16.msra.mxu0 0
    %742 = vmatprep.mubr.bf16.mxu0 0
    %743 = vmatmul.mubr.bf16.gmra.mrb[0].mxu0 %v708
    %v744 = vpop.f32.mrb[0].mxu0
    %v745 = vadd.f32 0.0, %v744
    %v746 = vpop.f32.mrb[0].mxu0
    %v747 = vpop.f32.mrb[0].mxu0
    %v748 = vadd.f32 0.0, %v747
    %v749 = vpop.f32.mrb[0].mxu0
    %750 = vdwg.mxu0
    %v751 = vpack.c.bf16 %v748, %v745
    %753 = vrot.lane.b32.xlu0 %v509, 8
    %v754 = vpop.permute.xlu0 %753
    %756 = vrot.lane.b32.xlu0 %v629, 16
    %v757 = vpop.permute.xlu0 %756
    %759 = vrot.lane.b32.xlu0 %v751, 24
    %v760 = vpop.permute.xlu0 %759
    %v763 = vsel %vm266, %v387, %v754
    %v765 = vsel %vm315, %v763, %v757
    %vm766 = vcmask 195584
    %v768 = vsel %vm766, %v765, %v760
    %v769 = vld [vmem:[#allocation8] sm:$0xf]
    %v770 = vld [vmem:[#allocation8 + $0x4] sm:$0xf]
    %v771 = vld [vmem:[#allocation8 + $0x8] sm:$0xf]
    %v772 = vld [vmem:[#allocation8 + $0xc] sm:$0xf]
    %v777 = vunpack.c.l.b16 %v769
    %v778 = vunpack.c.l.b16 %v770
    %v779 = vunpack.c.l.b16 %v771
    %v780 = vunpack.c.l.b16 %v772
    %v781 = vpack.c.b16 %v778, %v777
    %v782 = vpack.c.b16 %v780, %v779
    %v785 = vsel %vm89, %v768, 0
    %787 = vmatprep.subr.bf16.mxu0 0
    %788 = vmatpush1.bf16.msra.mxu0 %v781
    %789 = vmatprep.subr.bf16.mxu0 0
    %790 = vmatpush1.bf16.msra.mxu0 %v782
    %791 = vmatprep.subr.bf16.mxu0 0
    %792 = vmatpush1.bf16.msra.mxu0 0
    %793 = vmatprep.subr.bf16.mxu0 0
    %794 = vmatpush1.bf16.msra.mxu0 0
    %795 = vmatprep.subr.bf16.mxu0 0
    %796 = vmatpush1.bf16.msra.mxu0 0
    %797 = vmatprep.subr.bf16.mxu0 0
    %798 = vmatpush1.bf16.msra.mxu0 0
    %799 = vmatprep.subr.bf16.mxu0 0
    %800 = vmatpush1.bf16.msra.mxu0 0
    %801 = vmatprep.subr.bf16.mxu0 0
    %802 = vmatpush1.bf16.msra.mxu0 0
    %803 = vmatprep.subr.bf16.mxu0 0
    %804 = vmatpush1.bf16.msra.mxu0 0
    %805 = vmatprep.subr.bf16.mxu0 0
    %806 = vmatpush1.bf16.msra.mxu0 0
    %807 = vmatprep.subr.bf16.mxu0 0
    %808 = vmatpush1.bf16.msra.mxu0 0
    %809 = vmatprep.subr.bf16.mxu0 0
    %810 = vmatpush1.bf16.msra.mxu0 0
    %811 = vmatprep.subr.bf16.mxu0 0
    %812 = vmatpush1.bf16.msra.mxu0 0
    %813 = vmatprep.subr.bf16.mxu0 0
    %814 = vmatpush1.bf16.msra.mxu0 0
    %815 = vmatprep.subr.bf16.mxu0 0
    %816 = vmatpush1.bf16.msra.mxu0 0
    %817 = vmatprep.subr.bf16.mxu0 0
    %818 = vmatpush1.bf16.msra.mxu0 0
    %819 = vmatprep.mubr.bf16.mxu0 0
    %820 = vmatmul.mubr.bf16.gmra.mrb[0].mxu0 %v785
    %v821 = vpop.f32.mrb[0].mxu0
    %v822 = vadd.f32 0.0, %v821
    %v823 = vpop.f32.mrb[0].mxu0
    %v824 = vpop.f32.mrb[0].mxu0
    %v825 = vadd.f32 0.0, %v824
    %v826 = vpop.f32.mrb[0].mxu0
    %827 = vdwg.mxu0
    %828 = vst.msk [vmem:[#allocation10] sm:$0xff] %vm89, %v822
    %829 = vst.msk [vmem:[#allocation10 + $0x8] sm:$0xff] %vm89, %v825
    // Predicated region
    $region46: #{tpu_custom_call.1} parent=1 // pred_check
      _
    $region47: #{tpu_custom_call.1} parent=1 // pred_check_branch
      %831 = sbr.rel (0) target = $region49
    $region48: #{tpu_custom_call.1} parent=1 // pred_region
      %s833 = ssub.s32 256, 256
      %834 = vsyncadd [#allocation4], %s833
      %s835 = sshll.u32 [#allocation10], 4
      %s836 = int_to_ptr.vmem [resolvable:$true] %s835
      %841 = dma.vmem_to_hbm [thread:$0]  %s836, 256, %s7, [#allocation4], 128, 128, 8
    $region49: #{tpu_custom_call.1} parent=1 // pred_fallthru
      _
    // Predicated region
    $region50: #{tpu_custom_call.1} parent=1 // pred_check
      _
    $region51: #{tpu_custom_call.1} parent=1 // pred_check_branch
      %843 = sbr.rel (0) target = $region53
    $region52: #{tpu_custom_call.1} parent=1 // pred_region
      %844 = dma.done [#allocation4], 256
    $region53: #{tpu_custom_call.1} parent=1 // pred_fallthru
      _
    %845 = vsyncpa [#allocation3], 1
    %846 = vsyncpa [#allocation6], 1
    %847 = vsyncpa [#allocation9], 1
    %848 = vsyncpa [#allocation4], 1

</llo_original>
